<compile_context>
chip_gen: v6e
topology: v6e:2x2x1
jax: 0.10.0
libtpu: 0.0.40
codegen_flags: <defaults>
</compile_context>

<pallas_src>
import jax
import jax.numpy as jnp
from jax.experimental import pallas as pl
from jax.experimental.pallas import tpu as pltpu

IN_FEATURES = 3
OUT_FEATURES = 5
SUBLANES = 8  # f32 sublane count; OUT is zero-padded to this for full-vreg FMAs


def _default_tile_m():
    # Per-generation lane-tile size (multiple of 128), per perf guidance:
    #  * v6e: 128 MiB VMEM / ~1.4 TB/s HBM -> upper end of the tile range.
    #  * v5e: 16 MiB default scoped VMEM  -> 64K keeps 2x2 buffers at ~8 MiB.
    #  * v7x: 64 MiB physical VMEM, 2 TCs -> 64K keeps tiles paired (>=2 grid
    #    steps for megacore) and well under the ceiling.
    try:
        kind = jax.devices()[0].device_kind.lower()
    except Exception:
        kind = ""
    if "v6" in kind:
        return 131072
    return 65536


def _linear_kernel(w8_ref, b8_ref, x_ref, o_ref):
    # w8_ref: VMEM (8, IN)       -- w8[j, k] = W[k, j] for j < OUT, else 0.
    # b8_ref: VMEM (8, 1)        -- bias column, zero-padded to 8 sublanes.
    # x_ref : VMEM (IN, TILE_M)  -- feature-major input tile (M on lanes).
    # o_ref : VMEM (OUT, TILE_M) -- feature-major output tile (lane-dense).
    tile = x_ref.shape[1]
    x = x_ref[...].astype(jnp.float32)          # (IN, TILE_M)
    w8 = w8_ref[...]                            # (8, IN)
    acc = jnp.broadcast_to(b8_ref[...], (SUBLANES, tile))    # bias init
    for k in range(IN_FEATURES):
        # Sublane-broadcast input row k to a full (8, TILE_M) block and FMA
        # against the per-output-feature weight column -> 3 full-vreg FMAs.
        row = jnp.broadcast_to(x[k:k + 1, :], (SUBLANES, tile))
        acc = acc + row * w8[:, k:k + 1]
    # Lane-dense store of the 5 valid output rows (sublanes 5..7 are padding).
    o_ref[...] = acc[:OUT_FEATURES, :].astype(o_ref.dtype)


def linear_pallas(x, w, b, *, tile_m=None):
    """x: (..., IN_FEATURES) -> (..., OUT_FEATURES). w: (IN, OUT), b: (OUT,)."""
    assert x.shape[-1] == IN_FEATURES
    lead = x.shape[:-1]
    m = 1
    for d in lead:
        m *= d

    # Feature-major (lane-dense) layout: the big M axis on the lane dimension.
    # (This transpose and its inverse on the output are the only extra XLA
    # layout passes; they vanish if the surrounding graph stays feature-major.)
    x_t = x.reshape(m, IN_FEATURES).T            # (IN, M)

    if tile_m is None:
        tile_m = _default_tile_m()
    if m <= tile_m:
        tile_m = m          # single block spanning the whole array: no padding
    grid = (pl.cdiv(m, tile_m),)
    # When tile_m does not divide M, the ragged last block is masked by Pallas:
    # out-of-bounds input columns only produce output columns that are dropped.

    # Weights transposed to (OUT, IN), zero-padded to 8 output rows so a single
    # (8, TILE_M) FMA applies a different weight per sublane; bias as (8, 1).
    w8 = jnp.zeros((SUBLANES, IN_FEATURES), jnp.float32).at[:OUT_FEATURES].set(
        w.T.astype(jnp.float32))
    b8 = jnp.zeros((SUBLANES, 1), jnp.float32).at[:OUT_FEATURES, 0].set(
        b.astype(jnp.float32))

    cost = pl.CostEstimate(
        flops=2 * m * IN_FEATURES * OUT_FEATURES,
        transcendentals=0,
        bytes_accessed=4 * (m * (IN_FEATURES + OUT_FEATURES)
                            + SUBLANES * (IN_FEATURES + 1)),
    )

    # Double-buffered in+out VMEM working set (each buffer is sublane-padded
    # to 8 rows): 2 arrays x 2 buffers x (8 * tile_m * 4) bytes, plus headroom.
    buf_bytes = SUBLANES * tile_m * 4
    vmem_limit = min(64 * 1024 * 1024,
                     max(16 * 1024 * 1024, 4 * buf_bytes + (4 << 20)))

    out_t = pl.pallas_call(
        _linear_kernel,
        out_shape=jax.ShapeDtypeStruct((OUT_FEATURES, m), x.dtype),
        grid_spec=pltpu.PrefetchScalarGridSpec(
            num_scalar_prefetch=0,
            grid=grid,
            in_specs=[
                pl.BlockSpec((SUBLANES, IN_FEATURES), lambda i: (0, 0)),  # w8
                pl.BlockSpec((SUBLANES, 1), lambda i: (0, 0)),            # b8
                pl.BlockSpec((IN_FEATURES, tile_m), lambda i: (0, i)),    # x
            ],
            out_specs=pl.BlockSpec((OUT_FEATURES, tile_m), lambda i: (0, i)),
        ),
        compiler_params=pltpu.CompilerParams(
            dimension_semantics=("parallel",),      # megacore sharding on v7x
            vmem_limit_bytes=vmem_limit,
        ),
        cost_estimate=cost,
    )(w8, b8, x_t)

    out2d = out_t.T                               # (M, OUT)
    return out2d.reshape(*lead, OUT_FEATURES)


def init_params(key):
    # Deterministic init mimicking nn.Linear default: U(-1/sqrt(in), 1/sqrt(in)).
    kw, kb = jax.random.split(key)
    bound = 1.0 / jnp.sqrt(jnp.float32(IN_FEATURES))
    # Stored transposed as (IN, OUT) for the wrapper (PyTorch stores (OUT, IN)).
    w = jax.random.uniform(
        kw, (IN_FEATURES, OUT_FEATURES), jnp.float32, -bound, bound
    )
    b = jax.random.uniform(kb, (OUT_FEATURES,), jnp.float32, -bound, bound)
    return w, b


if __name__ == "__main__":
    key = jax.random.PRNGKey(0)
    kx, kp = jax.random.split(key)

    # Same shape as the module's example input: (5, 10, 25, 3).
    x = jax.random.normal(kx, (5, 10, 25, IN_FEATURES), dtype=jnp.float32)
    w, b = init_params(kp)

    out = linear_pallas(x, w, b)
    out = jax.block_until_ready(out)

    # Reference check against plain JAX.
    ref = x @ w + b
    assert out.shape == (5, 10, 25, OUT_FEATURES), out.shape
    assert jnp.allclose(out, ref, atol=1e-5, rtol=1e-5), float(
        jnp.max(jnp.abs(out - ref))
    )

    print("KERNEL_OK")
</pallas_src>

<mosaic_0001>
module attributes {stable_mosaic.version = 11 : i64} {
  func.func @_linear_kernel(%arg0: i32, %arg1: memref<8x3xf32, #tpu.memory_space<vmem>>, %arg2: memref<8x1xf32, #tpu.memory_space<vmem>>, %arg3: memref<3x1250xf32, #tpu.memory_space<vmem>>, %arg4: memref<5x1250xf32, #tpu.memory_space<vmem>>) attributes {dimension_semantics = [#tpu.dimension_semantics<parallel>], iteration_bounds = array<i64: 1>, scalar_prefetch = 0 : i64, scratch_operands = 0 : i64, tpu.core_type = #tpu.core_type<tc>, window_params = [{pipeline_mode = #tpu.pipeline_mode<synchronous>, transform_indices = @transform_0, window_bounds = array<i64: 8, 3>}, {pipeline_mode = #tpu.pipeline_mode<synchronous>, transform_indices = @transform_1, window_bounds = array<i64: 8, 1>}, {transform_indices = @transform_2, window_bounds = array<i64: 3, 1250>}, {transform_indices = @transform_3, window_bounds = array<i64: 5, 1250>}]} {
    %c0 = arith.constant 0 : index
    %c0_0 = arith.constant 0 : index
    %0 = vector.load %arg3[%c0, %c0_0] : memref<3x1250xf32, #tpu.memory_space<vmem>>, vector<3x1250xf32>
    %c0_1 = arith.constant 0 : index
    %c0_2 = arith.constant 0 : index
    %1 = vector.load %arg1[%c0_1, %c0_2] : memref<8x3xf32, #tpu.memory_space<vmem>>, vector<8x3xf32>
    %c0_3 = arith.constant 0 : index
    %c0_4 = arith.constant 0 : index
    %2 = vector.load %arg2[%c0_3, %c0_4] : memref<8x1xf32, #tpu.memory_space<vmem>>, vector<8x1xf32>
    %3 = vector.shape_cast %2 : vector<8x1xf32> to vector<8x1xf32>
    %4 = vector.broadcast %3 : vector<8x1xf32> to vector<8x1250xf32>
    %5 = vector.extract_strided_slice %0 {offsets = [0, 0], sizes = [1, 1250], strides = [1, 1]} : vector<3x1250xf32> to vector<1x1250xf32>
    %6 = vector.shape_cast %5 : vector<1x1250xf32> to vector<1x1250xf32>
    %7 = vector.broadcast %6 : vector<1x1250xf32> to vector<8x1250xf32>
    %8 = vector.extract_strided_slice %1 {offsets = [0, 0], sizes = [8, 1], strides = [1, 1]} : vector<8x3xf32> to vector<8x1xf32>
    %9 = vector.broadcast %8 : vector<8x1xf32> to vector<8x1250xf32>
    %10 = arith.mulf %7, %9 : vector<8x1250xf32>
    %11 = arith.addf %4, %10 : vector<8x1250xf32>
    %12 = vector.extract_strided_slice %0 {offsets = [1, 0], sizes = [1, 1250], strides = [1, 1]} : vector<3x1250xf32> to vector<1x1250xf32>
    %13 = vector.shape_cast %12 : vector<1x1250xf32> to vector<1x1250xf32>
    %14 = vector.broadcast %13 : vector<1x1250xf32> to vector<8x1250xf32>
    %15 = vector.extract_strided_slice %1 {offsets = [0, 1], sizes = [8, 1], strides = [1, 1]} : vector<8x3xf32> to vector<8x1xf32>
    %16 = vector.broadcast %15 : vector<8x1xf32> to vector<8x1250xf32>
    %17 = arith.mulf %14, %16 : vector<8x1250xf32>
    %18 = arith.addf %11, %17 : vector<8x1250xf32>
    %19 = vector.extract_strided_slice %0 {offsets = [2, 0], sizes = [1, 1250], strides = [1, 1]} : vector<3x1250xf32> to vector<1x1250xf32>
    %20 = vector.shape_cast %19 : vector<1x1250xf32> to vector<1x1250xf32>
    %21 = vector.broadcast %20 : vector<1x1250xf32> to vector<8x1250xf32>
    %22 = vector.extract_strided_slice %1 {offsets = [0, 2], sizes = [8, 1], strides = [1, 1]} : vector<8x3xf32> to vector<8x1xf32>
    %23 = vector.broadcast %22 : vector<8x1xf32> to vector<8x1250xf32>
    %24 = arith.mulf %21, %23 : vector<8x1250xf32>
    %25 = arith.addf %18, %24 : vector<8x1250xf32>
    %26 = vector.extract_strided_slice %25 {offsets = [0, 0], sizes = [5, 1250], strides = [1, 1]} : vector<8x1250xf32> to vector<5x1250xf32>
    %c0_5 = arith.constant 0 : index
    %c0_6 = arith.constant 0 : index
    %27 = vector.load %arg4[%c0_5, %c0_6] : memref<5x1250xf32, #tpu.memory_space<vmem>>, vector<5x1250xf32>
    tpu.vector_store %arg4[%c0_5, %c0_6], %26 {strides = array<i32>} : memref<5x1250xf32, #tpu.memory_space<vmem>>, vector<5x1250xf32>,
    return
  }
  func.func @transform_0(%arg0: i32) -> (i32, i32) {
    %c0_i32 = arith.constant 0 : i32
    %c0_i32_0 = arith.constant 0 : i32
    %c0_i32_1 = arith.constant 0 : i32
    return %c0_i32, %c0_i32_0 : i32, i32
  }
  func.func @transform_1(%arg0: i32) -> (i32, i32) {
    %c0_i32 = arith.constant 0 : i32
    %c0_i32_0 = arith.constant 0 : i32
    %c0_i32_1 = arith.constant 0 : i32
    return %c0_i32, %c0_i32_0 : i32, i32
  }
  func.func @transform_2(%arg0: i32) -> (i32, i32) {
    %c0_i32 = arith.constant 0 : i32
    %c0_i32_0 = arith.constant 0 : i32
    return %c0_i32, %arg0 : i32, i32
  }
  func.func @transform_3(%arg0: i32) -> (i32, i32) {
    %c0_i32 = arith.constant 0 : i32
    %c0_i32_0 = arith.constant 0 : i32
    return %c0_i32, %arg0 : i32, i32
  }
}

</mosaic_0001>

<llo_original>
// kernel: tpu_custom_call.1
$region0: #{tpu_custom_call.1}
  #allocation0 [shape = 'u32[]', space=smem, size = 0x4, offset = 0x4, fixed_abs, tag = 'smem constant byte address 0x4 - core index']
  #allocation1 [shape = 'u32[144,128]{1,0:T(1,128)}', space=vmem, size = 0x12000, scoped, tag = 'internal scratch']
  %s0 = inlined_call_operand.vmem [shape: f32[8,3], index: 0, kind: input, shape index: {}]
  %s1 = inlined_call_operand.vmem [shape: f32[8,1], index: 1, kind: input, shape index: {}]
  %s2 = inlined_call_operand.hbm [shape: f32[3,1250], index: 2, kind: input, shape index: {}]
  %s3 = inlined_call_operand.hbm [shape: f32[5,1250], index: 3, kind: output, shape index: {}]
  %s4 = sld [smem:[#allocation0]]
  $region26: #{tpu_custom_call.1} parent=0
    _
  %s6 = ssub.s32 1, %s4
  %s7 = scalar_select 0, %s6, %s4
  $region1: #{tpu_custom_call.1} parent=0
    #allocation2 [shape = 'u8[20480]{0}', space=vmem, size = 0x5000, scoped, tag = 'input window, operand 2, single buffered']
    #allocation3 [shape = 's32[1]{0}', space=sflag, size = 0x4, scoped, tag = 'scoped memory for tpu_custom_call.1']
    #allocation4 [shape = 's32[1]{0}', space=sflag, size = 0x4, scoped, tag = 'scoped memory for tpu_custom_call.1']
    #allocation5 [shape = 'u8[40960]{0}', space=vmem, size = 0xa000, scoped, tag = 'output window, operand 0, single buffered']
    %8 = vsyncpa [#allocation3], 0
    %9 = vsyncpa [#allocation4], 0
    // Predicated region
    $region2: #{tpu_custom_call.1} parent=1 // pred_check
      _
    $region3: #{tpu_custom_call.1} parent=1 // pred_check_branch
      %11 = sbr.rel (0) target = $region5
    $region4: #{tpu_custom_call.1} parent=1 // pred_region
      _
    $region5: #{tpu_custom_call.1} parent=1 // pred_fallthru
      _
    // Predicated region
    $region6: #{tpu_custom_call.1} parent=1 // pred_check
      _
    $region7: #{tpu_custom_call.1} parent=1 // pred_check_branch
      %13 = sbr.rel (0) target = $region9
    $region8: #{tpu_custom_call.1} parent=1 // pred_region
      _
    $region9: #{tpu_custom_call.1} parent=1 // pred_fallthru
      _
    // Predicated region
    $region10: #{tpu_custom_call.1} parent=1 // pred_check
      _
    $region11: #{tpu_custom_call.1} parent=1 // pred_check_branch
      %15 = sbr.rel (0) target = $region13
    $region12: #{tpu_custom_call.1} parent=1 // pred_region
      %s17 = ssub.s32 640, 640
      %18 = vsyncadd [#allocation3], %s17
      %s20 = sshll.u32 [#allocation2], 4
      %s21 = int_to_ptr.vmem [resolvable:$true] %s20
      %23 = dma.hbm_to_vmem [thread:$0]  %s2, 640, %s21, [#allocation3]
    $region13: #{tpu_custom_call.1} parent=1 // pred_fallthru
      _
    // Predicated region
    $region14: #{tpu_custom_call.1} parent=1 // pred_check
      _
    $region15: #{tpu_custom_call.1} parent=1 // pred_check_branch
      %25 = sbr.rel (0) target = $region17
    $region16: #{tpu_custom_call.1} parent=1 // pred_region
      %26 = dma.done [#allocation3], 640
    $region17: #{tpu_custom_call.1} parent=1 // pred_fallthru
      _
    %v27 = vld [vmem:[#allocation2] sm:$0x77]
    %v28 = vld [vmem:[#allocation2 + $0x8] sm:$0x77]
    %v29 = vld [vmem:[#allocation2 + $0x10] sm:$0x77]
    %v30 = vld [vmem:[#allocation2 + $0x18] sm:$0x77]
    %v31 = vld [vmem:[#allocation2 + $0x20] sm:$0x77]
    %v32 = vld [vmem:[%s0] sm:$0xff]
    %v33 = vld [vmem:[%s1] sm:$0xff]
    %35 = vset.pattern.permute.xlu0 0
    %36 = vperm.xlu0 %35, %v33
    %v37 = vpop.permute.xlu0 %36
    %v44 = vlaneseq
    %v45 = vshrl.u32 %v44, 7
    %v46 = vsub.s32 0, %v45
    %v47 = vrot.slane %v27, %v46
    %v48 = vlaneseq
    %v49 = vshrl.u32 %v48, 7
    %v50 = vsub.s32 4, %v49
    %v51 = vrot.slane %v27, %v50
    %v52 = vlaneseq
    %v53 = vshrl.u32 %v52, 7
    %v54 = vsub.s32 0, %v53
    %v55 = vrot.slane %v28, %v54
    %v56 = vlaneseq
    %v57 = vshrl.u32 %v56, 7
    %v58 = vsub.s32 4, %v57
    %v59 = vrot.slane %v28, %v58
    %v60 = vlaneseq
    %v61 = vshrl.u32 %v60, 7
    %v62 = vsub.s32 0, %v61
    %v63 = vrot.slane %v29, %v62
    %v64 = vlaneseq
    %v65 = vshrl.u32 %v64, 7
    %v66 = vsub.s32 4, %v65
    %v67 = vrot.slane %v29, %v66
    %v68 = vlaneseq
    %v69 = vshrl.u32 %v68, 7
    %v70 = vsub.s32 0, %v69
    %v71 = vrot.slane %v30, %v70
    %v72 = vlaneseq
    %v73 = vshrl.u32 %v72, 7
    %v74 = vsub.s32 4, %v73
    %v75 = vrot.slane %v30, %v74
    %v76 = vlaneseq
    %v77 = vshrl.u32 %v76, 7
    %v78 = vsub.s32 0, %v77
    %v79 = vrot.slane %v31, %v78
    %v80 = vlaneseq
    %v81 = vshrl.u32 %v80, 7
    %v82 = vsub.s32 4, %v81
    %v83 = vrot.slane %v31, %v82
    %v94 = vlaneseq
    %v95 = vshrl.u32 %v94, 7
    %v96 = vsub.s32 0, %v95
    %v97 = vrot.slane %v47, %v96
    %v98 = vlaneseq
    %v99 = vshrl.u32 %v98, 7
    %v100 = vsub.s32 0, %v99
    %v101 = vrot.slane %v51, %v100
    %v102 = vlaneseq
    %v103 = vshrl.u32 %v102, 7
    %v104 = vsub.s32 0, %v103
    %v105 = vrot.slane %v55, %v104
    %v106 = vlaneseq
    %v107 = vshrl.u32 %v106, 7
    %v108 = vsub.s32 0, %v107
    %v109 = vrot.slane %v59, %v108
    %v110 = vlaneseq
    %v111 = vshrl.u32 %v110, 7
    %v112 = vsub.s32 0, %v111
    %v113 = vrot.slane %v63, %v112
    %v114 = vlaneseq
    %v115 = vshrl.u32 %v114, 7
    %v116 = vsub.s32 0, %v115
    %v117 = vrot.slane %v67, %v116
    %v118 = vlaneseq
    %v119 = vshrl.u32 %v118, 7
    %v120 = vsub.s32 0, %v119
    %v121 = vrot.slane %v71, %v120
    %v122 = vlaneseq
    %v123 = vshrl.u32 %v122, 7
    %v124 = vsub.s32 0, %v123
    %v125 = vrot.slane %v75, %v124
    %v126 = vlaneseq
    %v127 = vshrl.u32 %v126, 7
    %v128 = vsub.s32 0, %v127
    %v129 = vrot.slane %v79, %v128
    %v130 = vlaneseq
    %v131 = vshrl.u32 %v130, 7
    %v132 = vsub.s32 0, %v131
    %v133 = vrot.slane %v83, %v132
    %135 = vset.pattern.permute.xlu0 0
    %136 = vperm.xlu0 %135, %v32
    %v137 = vpop.permute.xlu0 %136
    %v139 = vmul.f32 %v97, %v137
    %v140 = vmul.f32 %v101, %v137
    %v141 = vmul.f32 %v105, %v137
    %v142 = vmul.f32 %v109, %v137
    %v143 = vmul.f32 %v113, %v137
    %v144 = vmul.f32 %v117, %v137
    %v145 = vmul.f32 %v121, %v137
    %v146 = vmul.f32 %v125, %v137
    %v147 = vmul.f32 %v129, %v137
    %v148 = vmul.f32 %v133, %v137
    %v149 = vadd.f32 %v37, %v139
    %v150 = vadd.f32 %v37, %v140
    %v151 = vadd.f32 %v37, %v141
    %v152 = vadd.f32 %v37, %v142
    %v153 = vadd.f32 %v37, %v143
    %v154 = vadd.f32 %v37, %v144
    %v155 = vadd.f32 %v37, %v145
    %v156 = vadd.f32 %v37, %v146
    %v157 = vadd.f32 %v37, %v147
    %v158 = vadd.f32 %v37, %v148
    %v159 = vlaneseq
    %v160 = vshrl.u32 %v159, 7
    %v161 = vsub.s32 1, %v160
    %v162 = vrot.slane %v27, %v161
    %v163 = vlaneseq
    %v164 = vshrl.u32 %v163, 7
    %v165 = vsub.s32 5, %v164
    %v166 = vrot.slane %v27, %v165
    %v167 = vlaneseq
    %v168 = vshrl.u32 %v167, 7
    %v169 = vsub.s32 1, %v168
    %v170 = vrot.slane %v28, %v169
    %v171 = vlaneseq
    %v172 = vshrl.u32 %v171, 7
    %v173 = vsub.s32 5, %v172
    %v174 = vrot.slane %v28, %v173
    %v175 = vlaneseq
    %v176 = vshrl.u32 %v175, 7
    %v177 = vsub.s32 1, %v176
    %v178 = vrot.slane %v29, %v177
    %v179 = vlaneseq
    %v180 = vshrl.u32 %v179, 7
    %v181 = vsub.s32 5, %v180
    %v182 = vrot.slane %v29, %v181
    %v183 = vlaneseq
    %v184 = vshrl.u32 %v183, 7
    %v185 = vsub.s32 1, %v184
    %v186 = vrot.slane %v30, %v185
    %v187 = vlaneseq
    %v188 = vshrl.u32 %v187, 7
    %v189 = vsub.s32 5, %v188
    %v190 = vrot.slane %v30, %v189
    %v191 = vlaneseq
    %v192 = vshrl.u32 %v191, 7
    %v193 = vsub.s32 1, %v192
    %v194 = vrot.slane %v31, %v193
    %v195 = vlaneseq
    %v196 = vshrl.u32 %v195, 7
    %v197 = vsub.s32 5, %v196
    %v198 = vrot.slane %v31, %v197
    %v209 = vlaneseq
    %v210 = vshrl.u32 %v209, 7
    %v211 = vsub.s32 1, %v210
    %v212 = vrot.slane %v162, %v211
    %v213 = vlaneseq
    %v214 = vshrl.u32 %v213, 7
    %v215 = vsub.s32 1, %v214
    %v216 = vrot.slane %v166, %v215
    %v217 = vlaneseq
    %v218 = vshrl.u32 %v217, 7
    %v219 = vsub.s32 1, %v218
    %v220 = vrot.slane %v170, %v219
    %v221 = vlaneseq
    %v222 = vshrl.u32 %v221, 7
    %v223 = vsub.s32 1, %v222
    %v224 = vrot.slane %v174, %v223
    %v225 = vlaneseq
    %v226 = vshrl.u32 %v225, 7
    %v227 = vsub.s32 1, %v226
    %v228 = vrot.slane %v178, %v227
    %v229 = vlaneseq
    %v230 = vshrl.u32 %v229, 7
    %v231 = vsub.s32 1, %v230
    %v232 = vrot.slane %v182, %v231
    %v233 = vlaneseq
    %v234 = vshrl.u32 %v233, 7
    %v235 = vsub.s32 1, %v234
    %v236 = vrot.slane %v186, %v235
    %v237 = vlaneseq
    %v238 = vshrl.u32 %v237, 7
    %v239 = vsub.s32 1, %v238
    %v240 = vrot.slane %v190, %v239
    %v241 = vlaneseq
    %v242 = vshrl.u32 %v241, 7
    %v243 = vsub.s32 1, %v242
    %v244 = vrot.slane %v194, %v243
    %v245 = vlaneseq
    %v246 = vshrl.u32 %v245, 7
    %v247 = vsub.s32 1, %v246
    %v248 = vrot.slane %v198, %v247
    %249 = vset.pattern.permute.xlu0 1
    %250 = vperm.xlu0 %249, %v32
    %v251 = vpop.permute.xlu0 %250
    %v253 = vmul.f32 %v212, %v251
    %v254 = vmul.f32 %v216, %v251
    %v255 = vmul.f32 %v220, %v251
    %v256 = vmul.f32 %v224, %v251
    %v257 = vmul.f32 %v228, %v251
    %v258 = vmul.f32 %v232, %v251
    %v259 = vmul.f32 %v236, %v251
    %v260 = vmul.f32 %v240, %v251
    %v261 = vmul.f32 %v244, %v251
    %v262 = vmul.f32 %v248, %v251
    %v263 = vadd.f32 %v149, %v253
    %v264 = vadd.f32 %v150, %v254
    %v265 = vadd.f32 %v151, %v255
    %v266 = vadd.f32 %v152, %v256
    %v267 = vadd.f32 %v153, %v257
    %v268 = vadd.f32 %v154, %v258
    %v269 = vadd.f32 %v155, %v259
    %v270 = vadd.f32 %v156, %v260
    %v271 = vadd.f32 %v157, %v261
    %v272 = vadd.f32 %v158, %v262
    %v273 = vlaneseq
    %v274 = vshrl.u32 %v273, 7
    %v275 = vsub.s32 2, %v274
    %v276 = vrot.slane %v27, %v275
    %v277 = vlaneseq
    %v278 = vshrl.u32 %v277, 7
    %v279 = vsub.s32 6, %v278
    %v280 = vrot.slane %v27, %v279
    %v281 = vlaneseq
    %v282 = vshrl.u32 %v281, 7
    %v283 = vsub.s32 2, %v282
    %v284 = vrot.slane %v28, %v283
    %v285 = vlaneseq
    %v286 = vshrl.u32 %v285, 7
    %v287 = vsub.s32 6, %v286
    %v288 = vrot.slane %v28, %v287
    %v289 = vlaneseq
    %v290 = vshrl.u32 %v289, 7
    %v291 = vsub.s32 2, %v290
    %v292 = vrot.slane %v29, %v291
    %v293 = vlaneseq
    %v294 = vshrl.u32 %v293, 7
    %v295 = vsub.s32 6, %v294
    %v296 = vrot.slane %v29, %v295
    %v297 = vlaneseq
    %v298 = vshrl.u32 %v297, 7
    %v299 = vsub.s32 2, %v298
    %v300 = vrot.slane %v30, %v299
    %v301 = vlaneseq
    %v302 = vshrl.u32 %v301, 7
    %v303 = vsub.s32 6, %v302
    %v304 = vrot.slane %v30, %v303
    %v305 = vlaneseq
    %v306 = vshrl.u32 %v305, 7
    %v307 = vsub.s32 2, %v306
    %v308 = vrot.slane %v31, %v307
    %v309 = vlaneseq
    %v310 = vshrl.u32 %v309, 7
    %v311 = vsub.s32 6, %v310
    %v312 = vrot.slane %v31, %v311
    %v323 = vlaneseq
    %v324 = vshrl.u32 %v323, 7
    %v325 = vsub.s32 2, %v324
    %v326 = vrot.slane %v276, %v325
    %v327 = vlaneseq
    %v328 = vshrl.u32 %v327, 7
    %v329 = vsub.s32 2, %v328
    %v330 = vrot.slane %v280, %v329
    %v331 = vlaneseq
    %v332 = vshrl.u32 %v331, 7
    %v333 = vsub.s32 2, %v332
    %v334 = vrot.slane %v284, %v333
    %v335 = vlaneseq
    %v336 = vshrl.u32 %v335, 7
    %v337 = vsub.s32 2, %v336
    %v338 = vrot.slane %v288, %v337
    %v339 = vlaneseq
    %v340 = vshrl.u32 %v339, 7
    %v341 = vsub.s32 2, %v340
    %v342 = vrot.slane %v292, %v341
    %v343 = vlaneseq
    %v344 = vshrl.u32 %v343, 7
    %v345 = vsub.s32 2, %v344
    %v346 = vrot.slane %v296, %v345
    %v347 = vlaneseq
    %v348 = vshrl.u32 %v347, 7
    %v349 = vsub.s32 2, %v348
    %v350 = vrot.slane %v300, %v349
    %v351 = vlaneseq
    %v352 = vshrl.u32 %v351, 7
    %v353 = vsub.s32 2, %v352
    %v354 = vrot.slane %v304, %v353
    %v355 = vlaneseq
    %v356 = vshrl.u32 %v355, 7
    %v357 = vsub.s32 2, %v356
    %v358 = vrot.slane %v308, %v357
    %v359 = vlaneseq
    %v360 = vshrl.u32 %v359, 7
    %v361 = vsub.s32 2, %v360
    %v362 = vrot.slane %v312, %v361
    %363 = vset.pattern.permute.xlu0 2
    %364 = vperm.xlu0 %363, %v32
    %v365 = vpop.permute.xlu0 %364
    %v367 = vmul.f32 %v326, %v365
    %v368 = vmul.f32 %v330, %v365
    %v369 = vmul.f32 %v334, %v365
    %v370 = vmul.f32 %v338, %v365
    %v371 = vmul.f32 %v342, %v365
    %v372 = vmul.f32 %v346, %v365
    %v373 = vmul.f32 %v350, %v365
    %v374 = vmul.f32 %v354, %v365
    %v375 = vmul.f32 %v358, %v365
    %v376 = vmul.f32 %v362, %v365
    %v377 = vadd.f32 %v263, %v367
    %v378 = vadd.f32 %v264, %v368
    %v379 = vadd.f32 %v265, %v369
    %v380 = vadd.f32 %v266, %v370
    %v381 = vadd.f32 %v267, %v371
    %v382 = vadd.f32 %v268, %v372
    %v383 = vadd.f32 %v269, %v373
    %v384 = vadd.f32 %v270, %v374
    %v385 = vadd.f32 %v271, %v375
    %v386 = vadd.f32 %v272, %v376
    %387 = vst [vmem:[#allocation5] sm:$0x1f] %v377
    %388 = vst [vmem:[#allocation5 + $0x8] sm:$0x1f] %v378
    %389 = vst [vmem:[#allocation5 + $0x10] sm:$0x1f] %v379
    %390 = vst [vmem:[#allocation5 + $0x18] sm:$0x1f] %v380
    %391 = vst [vmem:[#allocation5 + $0x20] sm:$0x1f] %v381
    %392 = vst [vmem:[#allocation5 + $0x28] sm:$0x1f] %v382
    %393 = vst [vmem:[#allocation5 + $0x30] sm:$0x1f] %v383
    %394 = vst [vmem:[#allocation5 + $0x38] sm:$0x1f] %v384
    %395 = vst [vmem:[#allocation5 + $0x40] sm:$0x1f] %v385
    %vm396 = vcmask 798720
    %397 = vst.msk [vmem:[#allocation5 + $0x48] sm:$0x1f] %vm396, %v386
    // Predicated region
    $region18: #{tpu_custom_call.1} parent=1 // pred_check
      _
    $region19: #{tpu_custom_call.1} parent=1 // pred_check_branch
      %399 = sbr.rel (0) target = $region21
    $region20: #{tpu_custom_call.1} parent=1 // pred_region
      %s401 = ssub.s32 1280, 1280
      %402 = vsyncadd [#allocation4], %s401
      %s404 = sshll.u32 [#allocation5], 4
      %s405 = int_to_ptr.vmem [resolvable:$true] %s404
      %407 = dma.vmem_to_hbm [thread:$0]  %s405, 1280, %s3, [#allocation4]
    $region21: #{tpu_custom_call.1} parent=1 // pred_fallthru
      _
    // Predicated region
    $region22: #{tpu_custom_call.1} parent=1 // pred_check
      _
    $region23: #{tpu_custom_call.1} parent=1 // pred_check_branch
      %409 = sbr.rel (0) target = $region25
    $region24: #{tpu_custom_call.1} parent=1 // pred_region
      %410 = dma.done [#allocation4], 1280
    $region25: #{tpu_custom_call.1} parent=1 // pred_fallthru
      _
    %411 = vsyncpa [#allocation3], 1
    %412 = vsyncpa [#allocation4], 1

</llo_original>
